<compile_context>
chip_gen: v7x
topology: tpu7x:2x2x1
jax: 0.10.0
libtpu: 0.0.40
codegen_flags: <defaults>
</compile_context>

<pallas_src>
import functools

import jax
import jax.numpy as jnp
from jax import lax
from jax.experimental import pallas as pl
from jax.experimental.pallas import tpu as pltpu


def _round_up(x: int, m: int) -> int:
    return ((x + m - 1) // m) * m


def _lin_kernel(x_ref, w_ref, b_ref, o_ref, acc_ref):
    # x_ref: (tm, tk)   w_ref: (tn, tk)  [PyTorch layout, contract last dims]
    # b_ref: (1, tn)    o_ref: (tm, tn)  acc_ref: (tm, tn) f32 scratch
    k = pl.program_id(2)

    @pl.when(k == 0)
    def _init():
        acc_ref[...] = jnp.zeros_like(acc_ref)

    acc_ref[...] += lax.dot_general(
        x_ref[...], w_ref[...],
        dimension_numbers=(((1,), (1,)), ((), ())),   # x @ W^T
        preferred_element_type=jnp.float32,
    )

    @pl.when(k == pl.num_programs(2) - 1)
    def _finalize():
        o_ref[...] = (acc_ref[...] + b_ref[...]).astype(o_ref.dtype)


@functools.partial(jax.jit, static_argnames=("tm", "tn", "tk"))
def lin_forward(x, weight, bias, *, tm=256, tn=512, tk=512):
    """y = x @ weight^T + bias.

    x:      (B, in_dim)           float32
    weight: (out_dim, in_dim)     float32  (PyTorch nn.Linear layout, NOT transposed)
    bias:   (out_dim,)            float32
    """
    B, K = x.shape
    N, K2 = weight.shape
    assert K == K2, "in_dim mismatch between x and weight"
    assert bias.shape == (N,)

    # Clamp tiles to the (aligned) problem size so tiny shapes don't over-pad,
    # while keeping TPU layout alignment: sublane multiple of 8, lane multiple of 128.
    tm = min(tm, _round_up(B, 8))
    tn = min(tn, _round_up(N, 128))
    tk = min(tk, _round_up(K, 128))

    Bp = _round_up(B, tm)
    Kp = _round_up(K, tk)
    Np = _round_up(N, tn)

    # Zero-pad to tile multiples (zeros contribute nothing along K; padded
    # rows/cols are sliced off at the end).
    xp = x if (Bp == B and Kp == K) else jnp.pad(x, ((0, Bp - B), (0, Kp - K)))
    wp = weight if (Np == N and Kp == K) else jnp.pad(weight, ((0, Np - N), (0, Kp - K)))
    bp = bias if Np == N else jnp.pad(bias, (0, Np - N))
    b2 = bp.reshape(1, Np)

    grid = (Bp // tm, Np // tn, Kp // tk)

    flops = 2 * Bp * Kp * Np
    bytes_accessed = 4 * (Bp * Kp + Np * Kp + Np + Bp * Np)

    out_p = pl.pallas_call(
        _lin_kernel,
        out_shape=jax.ShapeDtypeStruct((Bp, Np), x.dtype),
        grid_spec=pltpu.PrefetchScalarGridSpec(
            num_scalar_prefetch=0,
            grid=grid,
            in_specs=[
                pl.BlockSpec((tm, tk), lambda i, j, k: (i, k)),   # x tile
                pl.BlockSpec((tn, tk), lambda i, j, k: (j, k)),   # W tile (PyTorch layout)
                pl.BlockSpec((1, tn), lambda i, j, k: (0, j)),    # bias tile
            ],
            out_specs=pl.BlockSpec((tm, tn), lambda i, j, k: (i, j)),
            scratch_shapes=[pltpu.VMEM((tm, tn), jnp.float32)],
        ),
        compiler_params=pltpu.CompilerParams(
            dimension_semantics=("parallel", "parallel", "arbitrary"),
            vmem_limit_bytes=48 * 1024 * 1024,  # > 32 MiB default, headroom on v7x
        ),
        cost_estimate=pl.CostEstimate(
            flops=flops, bytes_accessed=bytes_accessed, transcendentals=0),
    )(xp, wp, b2)

    if Bp == B and Np == N:
        return out_p
    return out_p[:B, :N]


if __name__ == "__main__":
    key = jax.random.PRNGKey(0)

    def run_case(B, in_dim, out_dim, key):
        kx, kw, kb = jax.random.split(key, 3)
        x = jax.random.normal(kx, (B, in_dim), dtype=jnp.float32)
        bound = 1.0 / jnp.sqrt(in_dim)
        weight = jax.random.uniform(kw, (out_dim, in_dim), minval=-bound,
                                    maxval=bound, dtype=jnp.float32)
        bias = jax.random.uniform(kb, (out_dim,), minval=-bound, maxval=bound,
                                  dtype=jnp.float32)
        y = lin_forward(x, weight, bias)
        jax.block_until_ready(y)
        y_ref = x @ weight.T + bias
        assert y.shape == (B, out_dim)
        assert jnp.allclose(y, y_ref, atol=1e-5, rtol=1e-5)

    k1, k2 = jax.random.split(key)
    # Small shapes consistent with LIN(in_dim, out_dim).
    run_case(B=16, in_dim=32, out_dim=64, key=k1)
    # Ragged (non tile-aligned) shapes exercise the padding path.
    run_case(B=10, in_dim=48, out_dim=96, key=k2)

    print("KERNEL_OK")
</pallas_src>

<mosaic_0001>
module attributes {stable_mosaic.version = 11 : i64} {
  func.func @_lin_kernel(%arg0: i32, %arg1: i32, %arg2: i32, %arg3: memref<16x128xf32, #tpu.memory_space<vmem>>, %arg4: memref<128x128xf32, #tpu.memory_space<vmem>>, %arg5: memref<1x128xf32, #tpu.memory_space<vmem>>, %arg6: memref<16x128xf32, #tpu.memory_space<vmem>>, %arg7: memref<16x128xf32, #tpu.memory_space<vmem>>) attributes {dimension_semantics = [#tpu.dimension_semantics<parallel>, #tpu.dimension_semantics<parallel>, #tpu.dimension_semantics<arbitrary>], iteration_bounds = array<i64: 1, 1, 1>, scalar_prefetch = 0 : i64, scratch_operands = 1 : i64, tpu.core_type = #tpu.core_type<tc>, window_params = [{transform_indices = @transform_0, window_bounds = array<i64: 16, 128>}, {transform_indices = @transform_1, window_bounds = array<i64: 128, 128>}, {transform_indices = @transform_2, window_bounds = array<i64: 1, 128>}, {transform_indices = @transform_3, window_bounds = array<i64: 16, 128>}]} {
    %c0_i32 = arith.constant 0 : i32
    %0 = arith.cmpi eq, %arg2, %c0_i32 : i32
    %1 = arith.extui %0 : i1 to i32
    %c0_i32_0 = arith.constant 0 : i32
    %2 = arith.cmpi ne, %1, %c0_i32_0 : i32
    scf.if %2 {
      %cst_10 = arith.constant 0.000000e+00 : f32
      %12 = vector.broadcast %cst_10 : f32 to vector<16x128xf32>
      %c0_11 = arith.constant 0 : index
      %c0_12 = arith.constant 0 : index
      %13 = vector.load %arg7[%c0_11, %c0_12] : memref<16x128xf32, #tpu.memory_space<vmem>>, vector<16x128xf32>
      tpu.vector_store %arg7[%c0_11, %c0_12], %12 {strides = array<i32>} : memref<16x128xf32, #tpu.memory_space<vmem>>, vector<16x128xf32>,
    } else {
    }
    %c0 = arith.constant 0 : index
    %c0_1 = arith.constant 0 : index
    %3 = vector.load %arg7[%c0, %c0_1] : memref<16x128xf32, #tpu.memory_space<vmem>>, vector<16x128xf32>
    %c0_2 = arith.constant 0 : index
    %c0_3 = arith.constant 0 : index
    %4 = vector.load %arg3[%c0_2, %c0_3] : memref<16x128xf32, #tpu.memory_space<vmem>>, vector<16x128xf32>
    %c0_4 = arith.constant 0 : index
    %c0_5 = arith.constant 0 : index
    %5 = vector.load %arg4[%c0_4, %c0_5] : memref<128x128xf32, #tpu.memory_space<vmem>>, vector<128x128xf32>
    %cst = arith.constant dense<0.000000e+00> : vector<16x128xf32>
    %6 = tpu.matmul %4, %5, %cst {dimension_numbers = #tpu.dot_dimension_numbers<[1], [1], [0], [0], [0, 0, 1, 0], [], []>} : vector<16x128xf32>, vector<128x128xf32>, vector<16x128xf32> -> vector<16x128xf32>
    %7 = arith.addf %3, %6 : vector<16x128xf32>
    %c0_6 = arith.constant 0 : index
    %c0_7 = arith.constant 0 : index
    %8 = vector.load %arg7[%c0_6, %c0_7] : memref<16x128xf32, #tpu.memory_space<vmem>>, vector<16x128xf32>
    tpu.vector_store %arg7[%c0_6, %c0_7], %7 {strides = array<i32>} : memref<16x128xf32, #tpu.memory_space<vmem>>, vector<16x128xf32>,
    %c0_i32_8 = arith.constant 0 : i32
    %9 = arith.cmpi eq, %arg2, %c0_i32_8 : i32
    %10 = arith.extui %9 : i1 to i32
    %c0_i32_9 = arith.constant 0 : i32
    %11 = arith.cmpi ne, %10, %c0_i32_9 : i32
    scf.if %11 {
      %c0_10 = arith.constant 0 : index
      %c0_11 = arith.constant 0 : index
      %12 = vector.load %arg7[%c0_10, %c0_11] : memref<16x128xf32, #tpu.memory_space<vmem>>, vector<16x128xf32>
      %c0_12 = arith.constant 0 : index
      %c0_13 = arith.constant 0 : index
      %13 = vector.load %arg5[%c0_12, %c0_13] : memref<1x128xf32, #tpu.memory_space<vmem>>, vector<1x128xf32>
      %14 = vector.broadcast %13 : vector<1x128xf32> to vector<16x128xf32>
      %15 = arith.addf %12, %14 : vector<16x128xf32>
      %c0_14 = arith.constant 0 : index
      %c0_15 = arith.constant 0 : index
      %16 = vector.load %arg6[%c0_14, %c0_15] : memref<16x128xf32, #tpu.memory_space<vmem>>, vector<16x128xf32>
      tpu.vector_store %arg6[%c0_14, %c0_15], %15 {strides = array<i32>} : memref<16x128xf32, #tpu.memory_space<vmem>>, vector<16x128xf32>,
    } else {
    }
    return
  }
  func.func @transform_0(%arg0: i32, %arg1: i32, %arg2: i32) -> (i32, i32) {
    %c0_i32 = arith.constant 0 : i32
    return %arg0, %arg2 : i32, i32
  }
  func.func @transform_1(%arg0: i32, %arg1: i32, %arg2: i32) -> (i32, i32) {
    %c0_i32 = arith.constant 0 : i32
    return %arg1, %arg2 : i32, i32
  }
  func.func @transform_2(%arg0: i32, %arg1: i32, %arg2: i32) -> (i32, i32) {
    %c0_i32 = arith.constant 0 : i32
    %c0_i32_0 = arith.constant 0 : i32
    return %c0_i32, %arg1 : i32, i32
  }
  func.func @transform_3(%arg0: i32, %arg1: i32, %arg2: i32) -> (i32, i32) {
    %c0_i32 = arith.constant 0 : i32
    return %arg0, %arg1 : i32, i32
  }
}

</mosaic_0001>

<llo_original>
// kernel: lin_forward.1
$region0: #{lin_forward.1}
  #allocation0 [shape = 'u32[]', space=smem, size = 0x4, offset = 0x4, fixed_abs, tag = 'smem constant byte address 0x4 - core index']
  #allocation1 [shape = 'u32[144,128]{1,0:T(1,128)}', space=vmem, size = 0x12000, scoped, tag = 'internal scratch']
  #allocation2 [shape = 'f32[16,128]{1,0:T(8,128)}', space=vmem, size = 0x2000, scoped, tag = 'scratch operand']
  %s0 = inlined_call_operand.vmem [shape: f32[16,128], index: 0, kind: input, shape index: {}]
  %s1 = inlined_call_operand.vmem [shape: f32[128,128], index: 1, kind: input, shape index: {}]
  %s2 = inlined_call_operand.vmem [shape: f32[1,128], index: 2, kind: input, shape index: {}]
  %s3 = inlined_call_operand.hbm [shape: f32[16,128], index: 3, kind: output, shape index: {}]
  %s4 = sld [smem:[#allocation0]]
  $region30: #{lin_forward.1} parent=0
    _
  %s6 = ssub.s32 1, %s4
  %s7 = scalar_select 0, %s6, %s4
  $region1: #{lin_forward.1} parent=0
    #allocation3 [shape = 'u8[8192]{0}', space=vmem, size = 0x2000, scoped, tag = 'output window, operand 0, single buffered']
    #allocation4 [shape = 's32[1]{0}', space=sflag, size = 0x4, scoped, tag = 'scoped memory for lin_forward.1']
    %8 = vsyncpa [#allocation4], 0
    // Predicated region
    $region2: #{lin_forward.1} parent=1 // pred_check
      _
    $region3: #{lin_forward.1} parent=1 // pred_check_branch
      %10 = sbr.rel (0) target = $region5
    $region4: #{lin_forward.1} parent=1 // pred_region
      _
    $region5: #{lin_forward.1} parent=1 // pred_fallthru
      _
    // Predicated region
    $region6: #{lin_forward.1} parent=1 // pred_check
      _
    $region7: #{lin_forward.1} parent=1 // pred_check_branch
      %12 = sbr.rel (0) target = $region9
    $region8: #{lin_forward.1} parent=1 // pred_region
      _
    $region9: #{lin_forward.1} parent=1 // pred_fallthru
      _
    // Predicated region
    $region10: #{lin_forward.1} parent=1 // pred_check
      _
    $region11: #{lin_forward.1} parent=1 // pred_check_branch
      %14 = sbr.rel (0) target = $region13
    $region12: #{lin_forward.1} parent=1 // pred_region
      _
    $region13: #{lin_forward.1} parent=1 // pred_fallthru
      _
    %p15 = scmp.eq.s32.totalorder 0, 0
    // Predicated region
    $region14: #{lin_forward.1} parent=1 // pred_check
      %p16 = pneg %p15
    $region15: #{lin_forward.1} parent=1 // pred_check_branch
      %18 = sbr.rel (%p16) target = $region17
    $region16: #{lin_forward.1} parent=1 // pred_region
      %19 = vst [vmem:[#allocation2] sm:$0xff] 0.0
      %20 = vst [vmem:[#allocation2 + $0x8] sm:$0xff] 0.0
    $region17: #{lin_forward.1} parent=1 // pred_fallthru
      _
    %v21 = vld [vmem:[#allocation2] sm:$0xff]
    %v22 = vld [vmem:[#allocation2 + $0x8] sm:$0xff]
    %v23 = vld [vmem:[%s0] sm:$0xff]
    %v24 = vld [vmem:[%s0 + $0x8] sm:$0xff]
    %v25 = vld [vmem:[%s1] sm:$0xff]
    %v26 = vld [vmem:[%s1 + $0x8] sm:$0xff]
    %v27 = vld [vmem:[%s1 + $0x10] sm:$0xff]
    %v28 = vld [vmem:[%s1 + $0x18] sm:$0xff]
    %v29 = vld [vmem:[%s1 + $0x20] sm:$0xff]
    %v30 = vld [vmem:[%s1 + $0x28] sm:$0xff]
    %v31 = vld [vmem:[%s1 + $0x30] sm:$0xff]
    %v32 = vld [vmem:[%s1 + $0x38] sm:$0xff]
    %v33 = vld [vmem:[%s1 + $0x40] sm:$0xff]
    %v34 = vld [vmem:[%s1 + $0x48] sm:$0xff]
    %v35 = vld [vmem:[%s1 + $0x50] sm:$0xff]
    %v36 = vld [vmem:[%s1 + $0x58] sm:$0xff]
    %v37 = vld [vmem:[%s1 + $0x60] sm:$0xff]
    %v38 = vld [vmem:[%s1 + $0x68] sm:$0xff]
    %v39 = vld [vmem:[%s1 + $0x70] sm:$0xff]
    %v40 = vld [vmem:[%s1 + $0x78] sm:$0xff]
    %41 = vmatprep.subr.mxu0 0.0
    %42 = vmatpush1.xpose.msra.mxu0 %v25
    %43 = vmatprep.subr.mxu0 0.0
    %44 = vmatpush1.xpose.msra.mxu0 %v26
    %45 = vmatprep.subr.mxu0 0.0
    %46 = vmatpush1.xpose.msra.mxu0 %v27
    %47 = vmatprep.subr.mxu0 0.0
    %48 = vmatpush1.xpose.msra.mxu0 %v28
    %49 = vmatprep.subr.mxu0 0.0
    %50 = vmatpush1.xpose.msra.mxu0 %v29
    %51 = vmatprep.subr.mxu0 0.0
    %52 = vmatpush1.xpose.msra.mxu0 %v30
    %53 = vmatprep.subr.mxu0 0.0
    %54 = vmatpush1.xpose.msra.mxu0 %v31
    %55 = vmatprep.subr.mxu0 0.0
    %56 = vmatpush1.xpose.msra.mxu0 %v32
    %57 = vmatprep.subr.mxu0 0.0
    %58 = vmatpush1.xpose.msra.mxu0 %v33
    %59 = vmatprep.subr.mxu0 0.0
    %60 = vmatpush1.xpose.msra.mxu0 %v34
    %61 = vmatprep.subr.mxu0 0.0
    %62 = vmatpush1.xpose.msra.mxu0 %v35
    %63 = vmatprep.subr.mxu0 0.0
    %64 = vmatpush1.xpose.msra.mxu0 %v36
    %65 = vmatprep.subr.mxu0 0.0
    %66 = vmatpush1.xpose.msra.mxu0 %v37
    %67 = vmatprep.subr.mxu0 0.0
    %68 = vmatpush1.xpose.msra.mxu0 %v38
    %69 = vmatprep.subr.mxu0 0.0
    %70 = vmatpush1.xpose.msra.mxu0 %v39
    %71 = vmatprep.subr.mxu0 0.0
    %72 = vmatpush1.xpose.msra.mxu0 %v40
    %73 = vmatprep.subr.mxu0 0.0
    %74 = vmatpush1.xpose.msra.mxu0 0.0
    %75 = vmatprep.subr.mxu0 0.0
    %76 = vmatpush1.xpose.msra.mxu0 0.0
    %77 = vmatprep.subr.mxu0 0.0
    %78 = vmatpush1.xpose.msra.mxu0 0.0
    %79 = vmatprep.subr.mxu0 0.0
    %80 = vmatpush1.xpose.msra.mxu0 0.0
    %81 = vmatprep.subr.mxu0 0.0
    %82 = vmatpush1.xpose.msra.mxu0 0.0
    %83 = vmatprep.subr.mxu0 0.0
    %84 = vmatpush1.xpose.msra.mxu0 0.0
    %85 = vmatprep.subr.mxu0 0.0
    %86 = vmatpush1.xpose.msra.mxu0 0.0
    %87 = vmatprep.subr.mxu0 0.0
    %88 = vmatpush1.xpose.msra.mxu0 0.0
    %89 = vmatprep.subr.mxu0 0.0
    %90 = vmatpush1.xpose.msra.mxu0 0.0
    %91 = vmatprep.subr.mxu0 0.0
    %92 = vmatpush1.xpose.msra.mxu0 0.0
    %93 = vmatprep.subr.mxu0 0.0
    %94 = vmatpush1.xpose.msra.mxu0 0.0
    %95 = vmatprep.subr.mxu0 0.0
    %96 = vmatpush1.xpose.msra.mxu0 0.0
    %97 = vmatprep.subr.mxu0 0.0
    %98 = vmatpush1.xpose.msra.mxu0 0.0
    %99 = vmatprep.subr.mxu0 0.0
    %100 = vmatpush1.xpose.msra.mxu0 0.0
    %101 = vmatprep.subr.mxu0 0.0
    %102 = vmatpush1.xpose.msra.mxu0 0.0
    %103 = vmatprep.subr.mxu0 0.0
    %104 = vmatpush1.xpose.msra.mxu0 0.0
    %105 = vmatprep.mubr.f32.mxu0 0.0
    %106 = vmatmul.mubr.f32.gmra.mrb[0].mxu0 %v23
    %v107 = vpop.f32.mrb[0].mxu0
    %v108 = vadd.f32 0.0, %v107
    %v109 = vpop.f32.mrb[0].mxu0
    %110 = vmatprep.mubr.f32.mxu0 0.0
    %111 = vmatmul.mubr.f32.gmra.mrb[0].mxu0 %v24
    %v112 = vpop.f32.mrb[0].mxu0
    %v113 = vadd.f32 0.0, %v112
    %v114 = vpop.f32.mrb[0].mxu0
    %115 = vdwg.mxu0
    %v116 = vadd.f32 %v21, %v108
    %v117 = vadd.f32 %v22, %v113
    %118 = vst [vmem:[#allocation2] sm:$0xff] %v116
    %119 = vst [vmem:[#allocation2 + $0x8] sm:$0xff] %v117
    // Predicated region
    $region18: #{lin_forward.1} parent=1 // pred_check
      %p120 = pneg %p15
    $region19: #{lin_forward.1} parent=1 // pred_check_branch
      %122 = sbr.rel (%p120) target = $region21
    $region20: #{lin_forward.1} parent=1 // pred_region
      %v123 = vld [vmem:[#allocation2] sm:$0xff]
      %v124 = vld [vmem:[#allocation2 + $0x8] sm:$0xff]
      %v125 = vld [vmem:[%s2] sm:$0x1]
      %v127 = vlaneseq
      %v128 = vshrl.u32 %v127, 7
      %v129 = vsub.s32 0, %v128
      %v130 = vrot.slane %v125, %v129
      %v132 = vadd.f32 %v123, %v130
      %v133 = vadd.f32 %v124, %v130
      %134 = vst [vmem:[#allocation3] sm:$0xff] %v132
      %135 = vst [vmem:[#allocation3 + $0x8] sm:$0xff] %v133
    $region21: #{lin_forward.1} parent=1 // pred_fallthru
      _
    // Predicated region
    $region22: #{lin_forward.1} parent=1 // pred_check
      _
    $region23: #{lin_forward.1} parent=1 // pred_check_branch
      %137 = sbr.rel (0) target = $region25
    $region24: #{lin_forward.1} parent=1 // pred_region
      %s139 = ssub.s32 256, 256
      %140 = vsyncadd [#allocation4], %s139
      %s141 = sshll.u32 [#allocation3], 4
      %s142 = int_to_ptr.vmem [resolvable:$true] %s141
      %147 = dma.vmem_to_hbm [thread:$0]  %s142, 256, %s3, [#allocation4], 128, 128, 8
    $region25: #{lin_forward.1} parent=1 // pred_fallthru
      _
    // Predicated region
    $region26: #{lin_forward.1} parent=1 // pred_check
      _
    $region27: #{lin_forward.1} parent=1 // pred_check_branch
      %149 = sbr.rel (0) target = $region29
    $region28: #{lin_forward.1} parent=1 // pred_region
      %150 = dma.done [#allocation4], 256
    $region29: #{lin_forward.1} parent=1 // pred_fallthru
      _
    %151 = vsyncpa [#allocation4], 1

</llo_original>
